<compile_context>
chip_gen: v7x
topology: tpu7x:2x2x1
jax: 0.10.0
libtpu: 0.0.40
codegen_flags: <defaults>
</compile_context>

<pallas_src>
import functools

import jax
import jax.numpy as jnp
from jax.experimental import pallas as pl
from jax.experimental.pallas import tpu as pltpu

LANES = 128
SUBLANES = 8
MAX_TILE_ROWS = 2048   # 1 MiB f32 block
MIN_TILE_ROWS = 256    # keep DMAs large enough to ride the HBM roofline
TARGET_TILES_PER_IMAGE = 4


def _adjust_gamma_kernel(gamma_ref, x_ref, o_ref, *, gain):
    # gamma_ref: (B,) f32 in SMEM (scalar prefetch) -- per-batch gamma.
    # x_ref / o_ref: (1, TILE_ROWS, 128) f32 blocks of one image.
    g = gamma_ref[pl.program_id(0)]
    x = x_ref[...]

    @pl.when(g == 1.0)
    def _():
        # Common ones-init case: pure streaming copy (times gain).
        if gain != 1.0:
            o_ref[...] = x * gain
        else:
            o_ref[...] = x

    @pl.when(g != 1.0)
    def _():
        # x ** g for x >= 0 (reference asserts non-negative inputs):
        # exp(g * log(x)) on the EUP.  log(0) = -inf / NaN lanes are discarded
        # by the final select; 0**g = 0 for g != 0 and 0**0 = 1 (torch.pow).
        powed = jnp.exp(g * jnp.log(x))
        zero_val = jnp.where(g == 0.0, 1.0, 0.0)  # scalar; intentional exact compare
        y = jnp.where(x > 0.0, powed, zero_val)
        if gain != 1.0:  # statically known; skip the multiply when it's a no-op
            y = y * gain
        o_ref[...] = y
    # TODO(synk): x == 0 with gamma < 0 returns 0 here, whereas torch.pow(0., neg) is +inf.


def adjust_gamma_forward(imgs, gamma, gain=1.0):
    """Pallas equivalent of AdjustGamma.forward.

    imgs:  (B, C, H, W) float32, assumed non-negative (reference raises otherwise)
    gamma: (B, 1) float32 (per-batch learnable scalar)
    """
    b, c, h, w = imgs.shape
    n = c * h * w

    # View each image as (rows, 128) lane-dense slabs.  Only pad to a multiple
    # of 128 lanes when strictly required for the reshape (no tile-multiple
    # rounding, no full-tensor pad for aligned shapes).
    rows = pl.cdiv(n, LANES)
    n_lanes = rows * LANES

    x = imgs.reshape(b, n)
    if n_lanes != n:
        x = jnp.pad(x, ((0, 0), (0, n_lanes - n)))
    x = x.reshape(b, rows, LANES)

    # Tile size: aim for >= TARGET_TILES_PER_IMAGE row-tiles per image so the
    # pipeline has steps to overlap, floor MIN_TILE_ROWS rows, cap
    # MAX_TILE_ROWS, multiple of 8 sublanes.
    tile_rows = min(MAX_TILE_ROWS, max(MIN_TILE_ROWS,
                                       pl.cdiv(rows, TARGET_TILES_PER_IMAGE)))
    tile_rows = pl.cdiv(tile_rows, SUBLANES) * SUBLANES
    rows8 = pl.cdiv(rows, SUBLANES) * SUBLANES
    tile_rows = max(SUBLANES, min(tile_rows, rows8))

    row_tiles = pl.cdiv(rows, tile_rows)
    grid = (b, row_tiles)

    n_total = b * rows * LANES
    cost = pl.CostEstimate(
        flops=5 * n_total,
        transcendentals=2 * n_total,
        bytes_accessed=8 * n_total,
    )

    out = pl.pallas_call(
        functools.partial(_adjust_gamma_kernel, gain=float(gain)),
        out_shape=jax.ShapeDtypeStruct((b, rows, LANES), jnp.float32),
        grid_spec=pltpu.PrefetchScalarGridSpec(
            num_scalar_prefetch=1,
            grid=grid,
            in_specs=[
                # (1, TILE_ROWS, 128) image slab; index_map sees the prefetch
                # gamma ref as a trailing positional arg.
                pl.BlockSpec((1, tile_rows, LANES),
                             lambda bi, ri, gamma_r: (bi, ri, 0)),
            ],
            out_specs=pl.BlockSpec((1, tile_rows, LANES),
                                   lambda bi, ri, gamma_r: (bi, ri, 0)),
        ),
        compiler_params=pltpu.CompilerParams(
            dimension_semantics=("parallel", "parallel"),
        ),
        cost_estimate=cost,
    )(gamma.reshape(-1).astype(jnp.float32), x)

    if n_lanes != n:
        return out.reshape(b, n_lanes)[:, :n].reshape(b, c, h, w)
    return out.reshape(b, c, h, w)


if __name__ == "__main__":
    key = jax.random.PRNGKey(0)
    B, C, H, W = 2, 4, 16, 16

    # Non-negative image (the reference raises on negative values); include an
    # exact zero to exercise the 0**gamma branch.
    imgs = jax.random.uniform(key, (B, C, H, W), dtype=jnp.float32)
    imgs = imgs.at[0, 0, 0, 0].set(0.0)

    # Per-batch gamma (learnable parameter of the module; init is ones when
    # random_init=False -- use non-trivial values here to exercise the kernel).
    gamma = jnp.array([[0.8], [2.2]], dtype=jnp.float32)
    gain = 1.0

    out = adjust_gamma_forward(imgs, gamma, gain=gain)
    out = jax.block_until_ready(out)

    # Reference in plain JAX (gain * x ** gamma, broadcast per batch).
    ref = gain * jnp.power(
        imgs.reshape(B, -1), gamma.reshape(-1, 1)
    ).reshape(B, C, H, W)
    assert out.shape == (B, C, H, W)
    assert jnp.allclose(out, ref, atol=1e-5, rtol=1e-5)

    # Default-init (gamma = ones) path: exercises the pl.when fast path and
    # must match identity * gain.
    out_ones = jax.block_until_ready(
        adjust_gamma_forward(imgs, jnp.ones((B, 1), jnp.float32), gain=gain)
    )
    assert jnp.allclose(out_ones, gain * imgs, atol=1e-5, rtol=1e-5)

    print("KERNEL_OK")
</pallas_src>

<mosaic_0001>
module attributes {stable_mosaic.version = 11 : i64} {
  func.func @_adjust_gamma_kernel(%arg0: i32, %arg1: i32, %arg2: memref<2xf32, #tpu.memory_space<smem>>, %arg3: memref<1x8x128xf32, #tpu.memory_space<vmem>>, %arg4: memref<1x8x128xf32, #tpu.memory_space<vmem>>) attributes {dimension_semantics = [#tpu.dimension_semantics<parallel>, #tpu.dimension_semantics<parallel>], iteration_bounds = array<i64: 2, 1>, scalar_prefetch = 1 : i64, scratch_operands = 0 : i64, tpu.core_type = #tpu.core_type<tc>, window_params = [{transform_indices = @transform_0, window_bounds = array<i64: 1, 8, 128>}, {transform_indices = @transform_1, window_bounds = array<i64: 1, 8, 128>}]} {
    %0 = arith.index_cast %arg0 : i32 to index
    %1 = memref.load %arg2[%0] : memref<2xf32, #tpu.memory_space<smem>>
    %c0 = arith.constant 0 : index
    %c0_0 = arith.constant 0 : index
    %c0_1 = arith.constant 0 : index
    %2 = vector.load %arg3[%c0, %c0_0, %c0_1] : memref<1x8x128xf32, #tpu.memory_space<vmem>>, vector<1x8x128xf32>
    %cst = arith.constant 1.000000e+00 : f32
    %3 = arith.cmpf oeq, %1, %cst : f32
    %4 = arith.extui %3 : i1 to i32
    %c0_i32 = arith.constant 0 : i32
    %5 = arith.cmpi ne, %4, %c0_i32 : i32
    scf.if %5 {
      %c0_4 = arith.constant 0 : index
      %c0_5 = arith.constant 0 : index
      %c0_6 = arith.constant 0 : index
      %9 = vector.load %arg4[%c0_4, %c0_5, %c0_6] : memref<1x8x128xf32, #tpu.memory_space<vmem>>, vector<1x8x128xf32>
      tpu.vector_store %arg4[%c0_4, %c0_5, %c0_6], %2 {strides = array<i32>} : memref<1x8x128xf32, #tpu.memory_space<vmem>>, vector<1x8x128xf32>,
    } else {
    }
    %cst_2 = arith.constant 1.000000e+00 : f32
    %6 = arith.cmpf one, %1, %cst_2 : f32
    %7 = arith.extui %6 : i1 to i32
    %c0_i32_3 = arith.constant 0 : i32
    %8 = arith.cmpi ne, %7, %c0_i32_3 : i32
    scf.if %8 {
      %9 = math.log %2 : vector<1x8x128xf32>
      %10 = vector.broadcast %1 : f32 to vector<1x8x128xf32>
      %11 = arith.mulf %10, %9 : vector<1x8x128xf32>
      %12 = math.exp %11 : vector<1x8x128xf32>
      %cst_4 = arith.constant 0.000000e+00 : f32
      %13 = arith.cmpf oeq, %1, %cst_4 : f32
      %cst_5 = arith.constant 1.000000e+00 : f32
      %cst_6 = arith.constant 0.000000e+00 : f32
      %14 = arith.select %13, %cst_5, %cst_6 : f32
      %cst_7 = arith.constant 0.000000e+00 : f32
      %15 = vector.broadcast %cst_7 : f32 to vector<1x8x128xf32>
      %16 = arith.cmpf ogt, %2, %15 : vector<1x8x128xf32>
      %17 = vector.broadcast %14 : f32 to vector<1x8x128xf32>
      %18 = arith.select %16, %12, %17 : vector<1x8x128xi1>, vector<1x8x128xf32>
      %c0_8 = arith.constant 0 : index
      %c0_9 = arith.constant 0 : index
      %c0_10 = arith.constant 0 : index
      %19 = vector.load %arg4[%c0_8, %c0_9, %c0_10] : memref<1x8x128xf32, #tpu.memory_space<vmem>>, vector<1x8x128xf32>
      tpu.vector_store %arg4[%c0_8, %c0_9, %c0_10], %18 {strides = array<i32>} : memref<1x8x128xf32, #tpu.memory_space<vmem>>, vector<1x8x128xf32>,
    } else {
    }
    return
  }
  func.func @transform_0(%arg0: i32, %arg1: i32, %arg2: memref<2xf32, #tpu.memory_space<smem>>) -> (i32, i32, i32) {
    %c0_i32 = arith.constant 0 : i32
    %c0_i32_0 = arith.constant 0 : i32
    return %arg0, %arg1, %c0_i32 : i32, i32, i32
  }
  func.func @transform_1(%arg0: i32, %arg1: i32, %arg2: memref<2xf32, #tpu.memory_space<smem>>) -> (i32, i32, i32) {
    %c0_i32 = arith.constant 0 : i32
    %c0_i32_0 = arith.constant 0 : i32
    return %arg0, %arg1, %c0_i32 : i32, i32, i32
  }
}

</mosaic_0001>

<llo_original>
// kernel: tpu_custom_call.1
$region0: #{tpu_custom_call.1}
  #allocation0 [shape = 'u32[]', space=smem, size = 0x4, offset = 0x4, fixed_abs, tag = 'smem constant byte address 0x4 - core index']
  #allocation1 [shape = 'u32[144,128]{1,0:T(1,128)}', space=vmem, size = 0x12000, scoped, tag = 'internal scratch']
  #allocation2 [shape = 's32[1]{0}', space=sflag, size = 0x4, scoped, tag = 'scoped memory for tpu_custom_call.1']
  #allocation3 [shape = 'u8[512]{0}', space=smem, size = 0x200, scoped, tag = 'prefetched SMEM operand 0']
  %s0 = inlined_call_operand.hbm [shape: f32[2], index: 0, kind: input, shape index: {}]
  %s1 = inlined_call_operand.hbm [shape: f32[2,8,128], index: 1, kind: input, shape index: {}]
  %s2 = inlined_call_operand.hbm [shape: f32[2,8,128], index: 2, kind: output, shape index: {}]
  %s3 = sld [smem:[#allocation0]]
  $region49: #{tpu_custom_call.1} parent=0
    _
  %s5 = ssub.s32 1, %s3
  %s6 = scalar_select 0, %s5, %s3
  %8 = dma.hbm_to_smem %s0, 16, [#allocation3], [#allocation2]
  %9 = dma.done [#allocation2], 16
  %10 = sfence
  $region1: #{tpu_custom_call.1} parent=0
    #allocation4 [shape = 'u8[8192]{0}', space=vmem, size = 0x2000, scoped, tag = 'input window, operand 1']
    #allocation5 [shape = 's32[2]{0}', space=sflag, size = 0x8, scoped, tag = 'scoped memory for tpu_custom_call.1']
    #allocation6 [shape = 's32[2]{0}', space=sflag, size = 0x8, scoped, tag = 'scoped memory for tpu_custom_call.1']
    #allocation7 [shape = 'u8[8192]{0}', space=vmem, size = 0x2000, scoped, tag = 'output window, operand 0']
    %11 = vsyncpa [#allocation5], 0
    %s12 = scalar_lea.sflag [#allocation5], 1
    %13 = vsyncpa %s12, 0
    %14 = vsyncpa [#allocation6], 0
    %s15 = scalar_lea.sflag [#allocation6], 1
    %16 = vsyncpa %s15, 0
    loop: start=0, step=1, limit=4
    $region2: #{tpu_custom_call.1} parent=1 // loop_pre_header
      _
    $region3: #{tpu_custom_call.1} parent=1 // loop_header
      %s18 = sphi 0, %s22
      %p19 = scmp.ge.s32.totalorder %s18, 4
      %s25 = sphi 0, %s37
      %s26 = sphi 0, %s33
      %s27 = sphi 0, %s25
      %s28 = sphi 0, %s26
      %s29 = sphi 0, %s27
      %s30 = sphi 0, %s28
      %s42 = sphi 0, %s44
      %s45 = sphi 0, %s42
      %s46 = sphi 0, %s45
      %s62 = sphi 0, %s46
      %s70 = sphi 0, %s72
      %s73 = sphi 0, %s70
      %s74 = sphi 0, %s73
      %s90 = sphi 0, %s74
    $region4: #{tpu_custom_call.1} parent=1 // loop_header_branch
      %21 = sbr.rel (%p19) target = $region8
    $region5: #{tpu_custom_call.1} parent=1 // loop_body
      %s23 = ssub.s32 %s18, 1
      %s24 = ssub.s32 %s18, 2
      %s31 = sadd.s32 1, %s26
      %p32 = scmp.ge.s32.totalorder %s31, 1
      %s33 = scalar_select %p32, 0, %s31
      %s34 = sadd.s32 1, %s25
      %s35 = scalar_select %p32, %s34, %s25
      %p36 = scmp.ge.s32.totalorder %s35, 2
      %s37 = scalar_select %p36, 0, %s35
      %s38 = ssub.s32 %s25, %s37
      %s39 = ssub.s32 %s26, %s33
      %s40 = sor.u32 %s38, %s39
      %p41 = scmp.eq.s32.totalorder %s40, 0
      %s43 = sadd.s32 %s42, 1
      %s44 = scalar_select %p41, %s42, %s43
      %p47 = pneg %p41
      %p48 = scmp.eq.s32.totalorder %s18, 1
      %p49 = por %p47, %p48
      %p50 = scmp.ne.s32.totalorder %s42, %s45
      %p51 = scmp.eq.s32.totalorder %s18, 0
      %p52 = por %p50, %p51
      %p53 = scmp.ne.s32.totalorder %s42, %s45
      %p54 = scmp.eq.s32.totalorder %s23, 1
      %p55 = por %p53, %p54
      %p56 = scmp.ne.s32.totalorder %s45, %s46
      %p57 = scmp.eq.s32.totalorder %s23, 0
      %p58 = por %p56, %p57
      %p59 = scmp.ne.s32.totalorder %s45, %s46
      %p60 = scmp.eq.s32.totalorder %s24, 1
      %p61 = por %p59, %p60
      %p63 = scmp.ne.s32.totalorder %s46, %s62
      %p64 = scmp.eq.s32.totalorder %s24, 0
      %p65 = por %p63, %p64
      %s66 = ssub.s32 %s25, %s37
      %s67 = ssub.s32 %s26, %s33
      %s68 = sor.u32 %s66, %s67
      %p69 = scmp.eq.s32.totalorder %s68, 0
      %s71 = sadd.s32 %s70, 1
      %s72 = scalar_select %p69, %s70, %s71
      %p75 = pneg %p69
      %p76 = scmp.eq.s32.totalorder %s18, 1
      %p77 = por %p75, %p76
      %p78 = scmp.ne.s32.totalorder %s70, %s73
      %p79 = scmp.eq.s32.totalorder %s18, 0
      %p80 = por %p78, %p79
      %p81 = scmp.ne.s32.totalorder %s70, %s73
      %p82 = scmp.eq.s32.totalorder %s23, 1
      %p83 = por %p81, %p82
      %p84 = scmp.ne.s32.totalorder %s73, %s74
      %p85 = scmp.eq.s32.totalorder %s23, 0
      %p86 = por %p84, %p85
      %p87 = scmp.ne.s32.totalorder %s73, %s74
      %p88 = scmp.eq.s32.totalorder %s24, 1
      %p89 = por %p87, %p88
      %p91 = scmp.ne.s32.totalorder %s74, %s90
      %p92 = scmp.eq.s32.totalorder %s24, 0
      %p93 = por %p91, %p92
      %p94 = scmp.le.s32.totalorder 1, %s18
      %p95 = scmp.lt.s32.totalorder %s18, 3
      %p96 = pnand %p94, %p95
      %p97 = pneg %p96
      // Predicated region
      $region9: #{tpu_custom_call.1} parent=5 // pred_check
        _
      $region10: #{tpu_custom_call.1} parent=5 // pred_check_branch
        %99 = sbr.rel (%p96) target = $region12
      $region11: #{tpu_custom_call.1} parent=5 // pred_region
        %s100 = ssub.s32 %s18, 1
      $region12: #{tpu_custom_call.1} parent=5 // pred_fallthru
        _
      %p101 = scmp.lt.s32.totalorder %s18, 2
      // Predicated region
      $region13: #{tpu_custom_call.1} parent=5 // pred_check
        %p102 = pneg %p101
      $region14: #{tpu_custom_call.1} parent=5 // pred_check_branch
        %104 = sbr.rel (%p102) target = $region16
      $region15: #{tpu_custom_call.1} parent=5 // pred_region
        // Predicated region
        $region17: #{tpu_custom_call.1} parent=15 // pred_check
          %p105 = pneg %p52
        $region18: #{tpu_custom_call.1} parent=15 // pred_check_branch
          %107 = sbr.rel (%p105) target = $region20
        $region19: #{tpu_custom_call.1} parent=15 // pred_region
          %s108 = sand.u32 %s42, 1
          %s109 = scalar_lea.sflag [#allocation5], %s108
          %s110 = sand.u32 %s42, 1
          %s111 = smul.addr %s110, 8
          %s112 = scalar_lea.vmem [#allocation4], %s111
          %s114 = ssub.s32 128, 128
          %115 = vsyncadd %s109, %s114
          %s116 = sadd.s32 %s26, %s25
          %s117 = smul.addr %s116, 128
          %s118 = scalar_lea.hbm %s1, %s117
          %s120 = sshll.u32 %s112, 4
          %s121 = int_to_ptr.vmem [resolvable:$true] %s120
          %123 = dma.hbm_to_vmem [thread:$0]  %s118, 128, %s121, %s109
        $region20: #{tpu_custom_call.1} parent=15 // pred_fallthru
          _
      $region16: #{tpu_custom_call.1} parent=5 // pred_fallthru
        _
      %p124 = scmp.le.s32.totalorder 1, %s18
      %p125 = scmp.lt.s32.totalorder %s18, 3
      %p126 = pnand %p124, %p125
      %p127 = pneg %p126
      // Predicated region
      $region21: #{tpu_custom_call.1} parent=5 // pred_check
        _
      $region22: #{tpu_custom_call.1} parent=5 // pred_check_branch
        %129 = sbr.rel (%p126) target = $region24
      $region23: #{tpu_custom_call.1} parent=5 // pred_region
        %s130 = ssub.s32 %s18, 1
        %s131 = sand.u32 %s45, 1
        %s132 = scalar_lea.sflag [#allocation5], %s131
        %s133 = sand.u32 %s45, 1
        %s134 = smul.addr %s133, 8
        %s135 = scalar_lea.vmem [#allocation4], %s134
        // Predicated region
        $region25: #{tpu_custom_call.1} parent=23 // pred_check
          %p136 = pneg %p58
        $region26: #{tpu_custom_call.1} parent=23 // pred_check_branch
          %138 = sbr.rel (%p136) target = $region28
        $region27: #{tpu_custom_call.1} parent=23 // pred_region
          %139 = dma.done %s132, 128
        $region28: #{tpu_custom_call.1} parent=23 // pred_fallthru
          _
        %s140 = sand.u32 %s45, 1
        %s141 = scalar_lea.sflag [#allocation5], %s140
        %s142 = sand.u32 %s45, 1
        %s143 = smul.addr %s142, 8
        %s144 = scalar_lea.vmem [#allocation4], %s143
        %p145 = pneg %p58
        %p146 = pneg %p55
        %p147 = pneg %p86
        %p148 = pneg %p83
        %s149 = sand.u32 %s73, 1
        %s150 = scalar_lea.sflag [#allocation6], %s149
        %s151 = sand.u32 %s73, 1
        %s152 = smul.addr %s151, 8
        %s153 = scalar_lea.vmem [#allocation7], %s152
        %s154 = sld [smem:[#allocation3 + %s27]]
        %v155 = vld [vmem:[%s135] sm:$0xff]
        %p156 = scmp.eq.f32.partialorder %s154, 1.0
        // Predicated region
        $region29: #{tpu_custom_call.1} parent=23 // pred_check
          %p157 = pneg %p156
        $region30: #{tpu_custom_call.1} parent=23 // pred_check_branch
          %159 = sbr.rel (%p157) target = $region32
        $region31: #{tpu_custom_call.1} parent=23 // pred_region
          %160 = vst [vmem:[%s153] sm:$0xff] %v155
        $region32: #{tpu_custom_call.1} parent=23 // pred_fallthru
          _
        %p161 = scmp.ne.f32.partialorder %s154, 1.0
        // Predicated region
        $region33: #{tpu_custom_call.1} parent=23 // pred_check
          %p162 = pneg %p161
        $region34: #{tpu_custom_call.1} parent=23 // pred_check_branch
          %164 = sbr.rel (%p162) target = $region36
        $region35: #{tpu_custom_call.1} parent=23 // pred_region
          %v165 = vlog2.pop %v155
          %v166 = vmul.f32 %v165, 0.6931472
          %v167 = vstv %s154
          %v168 = vmul.f32 %v167, %v166
          %v169 = vmul.f32 %v168, 1.442695
          %v170 = vpow.pop %v169
          %p171 = scmp.eq.f32.partialorder %s154, 0.0
          %s172 = scalar_select %p171, 1.0, 0.0
          %vm173 = vcmp.gt.f32.partialorder %v155, 0.0
          %v174 = vstv %s172
          %v175 = vsel %vm173, %v170, %v174
          %176 = vst [vmem:[%s153] sm:$0xff] %v175
        $region36: #{tpu_custom_call.1} parent=23 // pred_fallthru
          _
        %s177 = sand.u32 %s73, 1
        %s178 = scalar_lea.sflag [#allocation6], %s177
        %s179 = sand.u32 %s73, 1
        %s180 = smul.addr %s179, 8
        %s181 = scalar_lea.vmem [#allocation7], %s180
        // Predicated region
        $region37: #{tpu_custom_call.1} parent=23 // pred_check
          %p182 = pneg %p83
        $region38: #{tpu_custom_call.1} parent=23 // pred_check_branch
          %184 = sbr.rel (%p182) target = $region40
        $region39: #{tpu_custom_call.1} parent=23 // pred_region
          %s186 = ssub.s32 128, 128
          %187 = vsyncadd %s178, %s186
          %s188 = sadd.s32 %s28, %s27
          %s189 = smul.addr %s188, 128
          %s190 = scalar_lea.hbm %s2, %s189
          %s192 = sshll.u32 %s181, 4
          %s193 = int_to_ptr.vmem [resolvable:$true] %s192
          %195 = dma.vmem_to_hbm [thread:$0]  %s193, 128, %s190, %s178
        $region40: #{tpu_custom_call.1} parent=23 // pred_fallthru
          _
      $region24: #{tpu_custom_call.1} parent=5 // pred_fallthru
        _
      %p196 = scmp.le.s32.totalorder 2, %s18
      // Predicated region
      $region41: #{tpu_custom_call.1} parent=5 // pred_check
        %p197 = pneg %p196
      $region42: #{tpu_custom_call.1} parent=5 // pred_check_branch
        %199 = sbr.rel (%p197) target = $region44
      $region43: #{tpu_custom_call.1} parent=5 // pred_region
        %s200 = ssub.s32 %s18, 2
        // Predicated region
        $region45: #{tpu_custom_call.1} parent=43 // pred_check
          %p201 = pneg %p89
        $region46: #{tpu_custom_call.1} parent=43 // pred_check_branch
          %203 = sbr.rel (%p201) target = $region48
        $region47: #{tpu_custom_call.1} parent=43 // pred_region
          %s204 = sand.u32 %s74, 1
          %s205 = scalar_lea.sflag [#allocation6], %s204
          %s206 = sand.u32 %s74, 1
          %s207 = smul.addr %s206, 8
          %s208 = scalar_lea.vmem [#allocation7], %s207
          %209 = dma.done %s205, 128
        $region48: #{tpu_custom_call.1} parent=43 // pred_fallthru
          _
      $region44: #{tpu_custom_call.1} parent=5 // pred_fallthru
        _
    $region6: #{tpu_custom_call.1} parent=1 // loop_footer
      %s22 = sadd.s32 1, %s18
    $region7: #{tpu_custom_call.1} parent=1 // loop_footer_branch
      %17 = sbr.rel target = $region3
    $region8: #{tpu_custom_call.1} parent=1 // loop_exit
      _
    %210 = vsyncpa [#allocation5], 1
    %s211 = scalar_lea.sflag [#allocation5], 1
    %212 = vsyncpa %s211, 1
    %213 = vsyncpa [#allocation6], 1
    %s214 = scalar_lea.sflag [#allocation6], 1
    %215 = vsyncpa %s214, 1

</llo_original>
